<compile_context>
chip_gen: v7x
topology: tpu7x:2x2x1
jax: 0.10.0
libtpu: 0.0.40
codegen_flags: <defaults>
</compile_context>

<pallas_src>
import functools

import jax
import jax.numpy as jnp
from jax.experimental import pallas as pl
from jax.experimental.pallas import tpu as pltpu


def _gcn_kernel(adj_ref, x_ref, w_ref, b_ref, o_ref, *, reorder):
    # adj_ref: (Bb, TM, Np)   row tile of the (padded) adjacency
    # x_ref:   (Bb, Np, Fip)  full (padded) node features for these graphs
    # w_ref:   (Fip, Fop)     W^T, shared across the grid
    # b_ref:   (1, Fop)       bias, shared across the grid
    # o_ref:   (Bb, TM, Fop)
    adj = adj_ref[...]
    x = x_ref[...]
    w = w_ref[...]
    b = b_ref[...]

    # denom = sum(adj, -1, keepdim=True) + 1 ; one reciprocal per row, the
    # divide becomes a cheap VPU multiply (zero-padded columns contribute 0).
    denom = jnp.sum(adj, axis=-1, keepdims=True) + 1.0          # (Bb, TM, 1)
    inv = pl.reciprocal(denom, approx=False)

    if reorder:
        # adj @ (x @ W^T): cheaper when Fout << Fin.
        xw = jnp.einsum("bnf,fo->bno", x, w,
                        preferred_element_type=jnp.float32)      # (Bb, Np, Fop)
        axw = jnp.einsum("bmn,bno->bmo", adj, xw,
                         preferred_element_type=jnp.float32)     # (Bb, TM, Fop)
    else:
        # (adj @ x) @ W^T
        ax = jnp.einsum("bmn,bnf->bmf", adj, x,
                        preferred_element_type=jnp.float32)      # (Bb, TM, Fip)
        axw = jnp.einsum("bmf,fo->bmo", ax, w,
                         preferred_element_type=jnp.float32)     # (Bb, TM, Fop)

    out = jnp.maximum((axw + b) * inv, 0.0)
    o_ref[...] = out.astype(o_ref.dtype)


def _round_up(v, m):
    return ((v + m - 1) // m) * m


def _pad_axis(a, axis, target):
    pad = target - a.shape[axis]
    if pad == 0:
        return a
    widths = [(0, 0)] * a.ndim
    widths[axis] = (0, pad)
    return jnp.pad(a, widths)


def _pick_tiles(B, n_pad, fin_pad, fout_pad, budget_bytes=24 * 1024 * 1024):
    """Pick (batch block Bb, row tile TM) so double-buffered VMEM fits budget."""
    itemsize = 4

    def vmem_bytes(bb, tm):
        adj = 2 * bb * tm * n_pad
        x = 2 * bb * n_pad * fin_pad
        out = 2 * bb * tm * fout_pad
        w = 2 * (fin_pad * fout_pad + fout_pad)
        return (adj + x + out + w) * itemsize

    # Batch several small graphs per grid step to amortize per-step overhead.
    bb = 1
    if n_pad <= 256:
        for d in range(min(B, 8), 0, -1):
            if B % d == 0:
                bb = d
                break

    # Largest lane-aligned row tile that evenly divides n_pad and fits budget
    # (budget is conservative for v7x's 64 MiB VMEM / 32 MiB scoped default).
    tm = 128
    for cand in (1024, 512, 256, 128):
        if cand <= n_pad and n_pad % cand == 0 and vmem_bytes(bb, cand) <= budget_bytes:
            tm = cand
            break

    # If the batch block pushed us over budget, shrink it.
    while bb > 1 and vmem_bytes(bb, tm) > budget_bytes:
        bb -= 1
        while B % bb != 0:
            bb -= 1

    return bb, tm, vmem_bytes(bb, tm)


def gcn_forward(x, adj, weight, bias):
    """x: (B, N, Fin), adj: (B, N, N), weight: (Fout, Fin), bias: (Fout,)."""
    B, N, Fin = x.shape
    Fout = weight.shape[0]

    # Lane-dense padding: last dims to multiples of 128 (sliced off at the end).
    n_pad = _round_up(N, 128)
    fin_pad = _round_up(Fin, 128)
    fout_pad = _round_up(Fout, 128)

    bb, tm, vmem_est = _pick_tiles(B, n_pad, fin_pad, fout_pad)

    # Static matmul-order choice (accounts for re-doing x@W^T once per row tile).
    n_row_tiles = n_pad // tm
    flops_default = n_pad * n_pad * fin_pad + n_pad * fin_pad * fout_pad
    flops_reorder = n_row_tiles * n_pad * fin_pad * fout_pad + n_pad * n_pad * fout_pad
    reorder = flops_reorder < flops_default

    adj_p = _pad_axis(_pad_axis(adj, 1, n_pad), 2, n_pad)
    x_p = _pad_axis(_pad_axis(x, 1, n_pad), 2, fin_pad)
    w_t = _pad_axis(_pad_axis(weight.T, 0, fin_pad), 1, fout_pad)    # (Fin_p, Fout_p)
    b2d = _pad_axis(bias, 0, fout_pad).reshape(1, fout_pad)

    flops = 2 * B * (flops_reorder if reorder else flops_default)
    bytes_accessed = 4 * (B * n_pad * n_pad + B * n_pad * fin_pad
                          + B * n_pad * fout_pad + fin_pad * fout_pad + fout_pad)

    out_p = pl.pallas_call(
        functools.partial(_gcn_kernel, reorder=reorder),
        out_shape=jax.ShapeDtypeStruct((B, n_pad, fout_pad), x.dtype),
        grid_spec=pltpu.PrefetchScalarGridSpec(
            num_scalar_prefetch=0,
            grid=(B // bb, n_pad // tm),
            in_specs=[
                pl.BlockSpec((bb, tm, n_pad), lambda b, m: (b, m, 0)),       # adj rows
                pl.BlockSpec((bb, n_pad, fin_pad), lambda b, m: (b, 0, 0)),  # x (full)
                pl.BlockSpec((fin_pad, fout_pad), lambda b, m: (0, 0)),      # W^T
                pl.BlockSpec((1, fout_pad), lambda b, m: (0, 0)),            # bias
            ],
            out_specs=pl.BlockSpec((bb, tm, fout_pad), lambda b, m: (b, m, 0)),
        ),
        compiler_params=pltpu.CompilerParams(
            dimension_semantics=("parallel", "parallel"),
            vmem_limit_bytes=int(min(48 * 1024 * 1024,
                                     max(32 * 1024 * 1024, 2 * vmem_est))),
        ),
        cost_estimate=pl.CostEstimate(
            flops=flops, transcendentals=0, bytes_accessed=bytes_accessed),
    )(adj_p, x_p, w_t, b2d)

    return out_p[:, :N, :Fout]


def gcn_reference(x, adj, weight, bias):
    denom = jnp.sum(adj, axis=-1, keepdims=True) + 1.0
    ax = jnp.einsum("bij,bjf->bif", adj, x)
    axw = jnp.einsum("bif,of->bio", ax, weight) + bias
    return jnp.maximum(axw / denom, 0.0)


if __name__ == "__main__":
    key = jax.random.PRNGKey(0)

    def make_inputs(k, B, N, Fin, Fout):
        k_x, k_adj, k_w, k_b = jax.random.split(k, 4)
        x = jax.random.normal(k_x, (B, N, Fin), dtype=jnp.float32)
        # Nonnegative adjacency (like a normalized graph adjacency matrix).
        adj = jax.random.uniform(k_adj, (B, N, N), dtype=jnp.float32)
        bound = 1.0 / (Fin ** 0.5)
        weight = jax.random.uniform(k_w, (Fout, Fin), dtype=jnp.float32,
                                    minval=-bound, maxval=bound)
        bias = jax.random.uniform(k_b, (Fout,), dtype=jnp.float32,
                                  minval=-bound, maxval=bound)
        return x, adj, weight, bias

    k1, k2 = jax.random.split(key)

    # Case 1: square projection (default matmul order), small graph.
    x, adj, w, b = make_inputs(k1, B=2, N=16, Fin=32, Fout=32)
    out = jax.block_until_ready(gcn_forward(x, adj, w, b))
    ref = gcn_reference(x, adj, w, b)
    assert out.shape == ref.shape
    assert jnp.allclose(out, ref, atol=1e-4, rtol=1e-4), "mismatch vs reference (case 1)"

    # Case 2: shrinking projection with unaligned dims (exercises the reordered
    # matmul path, batch-block of 3, and lane padding).
    x, adj, w, b = make_inputs(k2, B=3, N=20, Fin=200, Fout=40)
    out = jax.block_until_ready(gcn_forward(x, adj, w, b))
    ref = gcn_reference(x, adj, w, b)
    assert out.shape == ref.shape
    assert jnp.allclose(out, ref, atol=1e-4, rtol=1e-4), "mismatch vs reference (case 2)"

    print("KERNEL_OK")
</pallas_src>

<mosaic_0001>
module attributes {stable_mosaic.version = 11 : i64} {
  func.func @_gcn_kernel(%arg0: i32, %arg1: i32, %arg2: memref<2x128x128xf32, #tpu.memory_space<vmem>>, %arg3: memref<2x128x128xf32, #tpu.memory_space<vmem>>, %arg4: memref<128x128xf32, #tpu.memory_space<vmem>>, %arg5: memref<1x128xf32, #tpu.memory_space<vmem>>, %arg6: memref<2x128x128xf32, #tpu.memory_space<vmem>>) attributes {dimension_semantics = [#tpu.dimension_semantics<parallel>, #tpu.dimension_semantics<parallel>], iteration_bounds = array<i64: 1, 1>, scalar_prefetch = 0 : i64, scratch_operands = 0 : i64, tpu.core_type = #tpu.core_type<tc>, window_params = [{transform_indices = @transform_0, window_bounds = array<i64: 2, 128, 128>}, {transform_indices = @transform_1, window_bounds = array<i64: 2, 128, 128>}, {pipeline_mode = #tpu.pipeline_mode<synchronous>, transform_indices = @transform_2, window_bounds = array<i64: 128, 128>}, {pipeline_mode = #tpu.pipeline_mode<synchronous>, transform_indices = @transform_3, window_bounds = array<i64: 1, 128>}, {transform_indices = @transform_4, window_bounds = array<i64: 2, 128, 128>}]} {
    %c0 = arith.constant 0 : index
    %c0_0 = arith.constant 0 : index
    %c0_1 = arith.constant 0 : index
    %0 = vector.load %arg2[%c0, %c0_0, %c0_1] : memref<2x128x128xf32, #tpu.memory_space<vmem>>, vector<2x128x128xf32>
    %c0_2 = arith.constant 0 : index
    %c0_3 = arith.constant 0 : index
    %c0_4 = arith.constant 0 : index
    %1 = vector.load %arg3[%c0_2, %c0_3, %c0_4] : memref<2x128x128xf32, #tpu.memory_space<vmem>>, vector<2x128x128xf32>
    %c0_5 = arith.constant 0 : index
    %c0_6 = arith.constant 0 : index
    %2 = vector.load %arg4[%c0_5, %c0_6] : memref<128x128xf32, #tpu.memory_space<vmem>>, vector<128x128xf32>
    %c0_7 = arith.constant 0 : index
    %c0_8 = arith.constant 0 : index
    %3 = vector.load %arg5[%c0_7, %c0_8] : memref<1x128xf32, #tpu.memory_space<vmem>>, vector<1x128xf32>
    %cst = arith.constant dense<0.000000e+00> : vector<2x128xf32>
    %4 = vector.multi_reduction <add>, %0, %cst [2] : vector<2x128x128xf32> to vector<2x128xf32>
    %5 = vector.shape_cast %4 : vector<2x128xf32> to vector<2x128x1xf32>
    %cst_9 = arith.constant 1.000000e+00 : f32
    %6 = vector.broadcast %cst_9 : f32 to vector<2x128x1xf32>
    %7 = arith.addf %5, %6 : vector<2x128x1xf32>
    %8 = tpu.reciprocal %7 : vector<2x128x1xf32> -> vector<2x128x1xf32>
    "tpu.trace_start"() <{level = 10 : i32, message = "bmn,bnf->bmf"}> : () -> ()
    %cst_10 = arith.constant dense<0.000000e+00> : vector<2x128x128xf32>
    %9 = tpu.matmul %0, %1, %cst_10 {dimension_numbers = #tpu.dot_dimension_numbers<[2], [1], [1], [2], [0, 0, 0, 1, 1, 2], [0], [0]>} : vector<2x128x128xf32>, vector<2x128x128xf32>, vector<2x128x128xf32> -> vector<2x128x128xf32>
    "tpu.trace_stop"() : () -> ()
    "tpu.trace_start"() <{level = 10 : i32, message = "bmf,fo->bmo"}> : () -> ()
    %cst_11 = arith.constant dense<0.000000e+00> : vector<2x128x128xf32>
    %10 = tpu.matmul %9, %2, %cst_11 {dimension_numbers = #tpu.dot_dimension_numbers<[2], [0], [0, 1], [1], [0, 0, 0, 1, 1, 1], [], []>} : vector<2x128x128xf32>, vector<128x128xf32>, vector<2x128x128xf32> -> vector<2x128x128xf32>
    "tpu.trace_stop"() : () -> ()
    %11 = vector.shape_cast %3 : vector<1x128xf32> to vector<1x1x128xf32>
    %12 = vector.broadcast %11 : vector<1x1x128xf32> to vector<2x128x128xf32>
    %13 = arith.addf %10, %12 : vector<2x128x128xf32>
    %14 = vector.broadcast %8 : vector<2x128x1xf32> to vector<2x128x128xf32>
    %15 = arith.mulf %13, %14 : vector<2x128x128xf32>
    %cst_12 = arith.constant 0.000000e+00 : f32
    %16 = vector.broadcast %cst_12 : f32 to vector<2x128x128xf32>
    %17 = arith.maximumf %15, %16 : vector<2x128x128xf32>
    %c0_13 = arith.constant 0 : index
    %c0_14 = arith.constant 0 : index
    %c0_15 = arith.constant 0 : index
    %18 = vector.load %arg6[%c0_13, %c0_14, %c0_15] : memref<2x128x128xf32, #tpu.memory_space<vmem>>, vector<2x128x128xf32>
    tpu.vector_store %arg6[%c0_13, %c0_14, %c0_15], %17 {strides = array<i32>} : memref<2x128x128xf32, #tpu.memory_space<vmem>>, vector<2x128x128xf32>,
    return
  }
  func.func @transform_0(%arg0: i32, %arg1: i32) -> (i32, i32, i32) {
    %c0_i32 = arith.constant 0 : i32
    %c0_i32_0 = arith.constant 0 : i32
    return %arg0, %arg1, %c0_i32 : i32, i32, i32
  }
  func.func @transform_1(%arg0: i32, %arg1: i32) -> (i32, i32, i32) {
    %c0_i32 = arith.constant 0 : i32
    %c0_i32_0 = arith.constant 0 : i32
    %c0_i32_1 = arith.constant 0 : i32
    return %arg0, %c0_i32, %c0_i32_0 : i32, i32, i32
  }
  func.func @transform_2(%arg0: i32, %arg1: i32) -> (i32, i32) {
    %c0_i32 = arith.constant 0 : i32
    %c0_i32_0 = arith.constant 0 : i32
    %c0_i32_1 = arith.constant 0 : i32
    return %c0_i32, %c0_i32_0 : i32, i32
  }
  func.func @transform_3(%arg0: i32, %arg1: i32) -> (i32, i32) {
    %c0_i32 = arith.constant 0 : i32
    %c0_i32_0 = arith.constant 0 : i32
    %c0_i32_1 = arith.constant 0 : i32
    return %c0_i32, %c0_i32_0 : i32, i32
  }
  func.func @transform_4(%arg0: i32, %arg1: i32) -> (i32, i32, i32) {
    %c0_i32 = arith.constant 0 : i32
    %c0_i32_0 = arith.constant 0 : i32
    return %arg0, %arg1, %c0_i32 : i32, i32, i32
  }
}

</mosaic_0001>

<llo_original>
// kernel: tpu_custom_call.1
$region0: #{tpu_custom_call.1}
  #allocation0 [shape = 'u32[]', space=smem, size = 0x4, offset = 0x4, fixed_abs, tag = 'smem constant byte address 0x4 - core index']
  #allocation1 [shape = 'u32[144,128]{1,0:T(1,128)}', space=vmem, size = 0x12000, scoped, tag = 'internal scratch']
  %s0 = inlined_call_operand.hbm [shape: f32[2,128,128], index: 0, kind: input, shape index: {}]
  %s1 = inlined_call_operand.hbm [shape: f32[2,128,128], index: 1, kind: input, shape index: {}]
  %s2 = inlined_call_operand.hbm [shape: f32[128,128], index: 2, kind: input, shape index: {}]
  %s3 = inlined_call_operand.vmem [shape: f32[1,128], index: 3, kind: input, shape index: {}]
  %s4 = inlined_call_operand.hbm [shape: f32[2,128,128], index: 4, kind: output, shape index: {}]
  %s5 = sld [smem:[#allocation0]]
  $region38: #{tpu_custom_call.1} parent=0
    _
  %s7 = ssub.s32 1, %s5
  %s8 = scalar_select 0, %s7, %s5
  $region1: #{tpu_custom_call.1} parent=0
    #allocation2 [shape = 'u8[131072]{0}', space=vmem, size = 0x20000, scoped, tag = 'input window, operand 0, single buffered']
    #allocation3 [shape = 's32[1]{0}', space=sflag, size = 0x4, scoped, tag = 'scoped memory for tpu_custom_call.1']
    #allocation4 [shape = 's32[1]{0}', space=sflag, size = 0x4, scoped, tag = 'scoped memory for tpu_custom_call.1']
    #allocation5 [shape = 'u8[131072]{0}', space=vmem, size = 0x20000, scoped, tag = 'input window, operand 1, single buffered']
    #allocation6 [shape = 's32[1]{0}', space=sflag, size = 0x4, scoped, tag = 'scoped memory for tpu_custom_call.1']
    #allocation7 [shape = 'u8[65536]{0}', space=vmem, size = 0x10000, scoped, tag = 'input window, operand 2, single buffered']
    #allocation8 [shape = 'u8[131072]{0}', space=vmem, size = 0x20000, scoped, tag = 'output window, operand 0, single buffered']
    %9 = vsyncpa [#allocation3], 0
    %10 = vsyncpa [#allocation6], 0
    %11 = vsyncpa [#allocation4], 0
    // Predicated region
    $region2: #{tpu_custom_call.1} parent=1 // pred_check
      _
    $region3: #{tpu_custom_call.1} parent=1 // pred_check_branch
      %13 = sbr.rel (0) target = $region5
    $region4: #{tpu_custom_call.1} parent=1 // pred_region
      %s15 = ssub.s32 4096, 4096
      %16 = vsyncadd [#allocation3], %s15
      %s17 = sshll.u32 [#allocation2], 4
      %s18 = int_to_ptr.vmem [resolvable:$true] %s17
      %23 = dma.hbm_to_vmem [thread:$0]  %s0, 4096, %s18, [#allocation3], 128, 128, 8
    $region5: #{tpu_custom_call.1} parent=1 // pred_fallthru
      _
    // Predicated region
    $region6: #{tpu_custom_call.1} parent=1 // pred_check
      _
    $region7: #{tpu_custom_call.1} parent=1 // pred_check_branch
      %25 = sbr.rel (0) target = $region9
    $region8: #{tpu_custom_call.1} parent=1 // pred_region
      %s27 = ssub.s32 4096, 4096
      %28 = vsyncadd [#allocation6], %s27
      %s29 = sshll.u32 [#allocation5], 4
      %s30 = int_to_ptr.vmem [resolvable:$true] %s29
      %35 = dma.hbm_to_vmem [thread:$0]  %s1, 4096, %s30, [#allocation6], 128, 128, 8
    $region9: #{tpu_custom_call.1} parent=1 // pred_fallthru
      _
    // Predicated region
    $region10: #{tpu_custom_call.1} parent=1 // pred_check
      _
    $region11: #{tpu_custom_call.1} parent=1 // pred_check_branch
      %37 = sbr.rel (0) target = $region13
    $region12: #{tpu_custom_call.1} parent=1 // pred_region
      %s39 = ssub.s32 2048, 2048
      %40 = vsyncadd [#allocation6], %s39
      %s41 = sshll.u32 [#allocation7], 4
      %s42 = int_to_ptr.vmem [resolvable:$true] %s41
      %47 = dma.hbm_to_vmem [thread:$0]  %s2, 2048, %s42, [#allocation6], 128, 128, 8
    $region13: #{tpu_custom_call.1} parent=1 // pred_fallthru
      _
    // Predicated region
    $region14: #{tpu_custom_call.1} parent=1 // pred_check
      _
    $region15: #{tpu_custom_call.1} parent=1 // pred_check_branch
      %49 = sbr.rel (0) target = $region17
    $region16: #{tpu_custom_call.1} parent=1 // pred_region
      _
    $region17: #{tpu_custom_call.1} parent=1 // pred_fallthru
      _
    // Predicated region
    $region18: #{tpu_custom_call.1} parent=1 // pred_check
      _
    $region19: #{tpu_custom_call.1} parent=1 // pred_check_branch
      %51 = sbr.rel (0) target = $region21
    $region20: #{tpu_custom_call.1} parent=1 // pred_region
      %52 = dma.done [#allocation3], 4096
    $region21: #{tpu_custom_call.1} parent=1 // pred_fallthru
      _
    // Predicated region
    $region22: #{tpu_custom_call.1} parent=1 // pred_check
      _
    $region23: #{tpu_custom_call.1} parent=1 // pred_check_branch
      %54 = sbr.rel (0) target = $region25
    $region24: #{tpu_custom_call.1} parent=1 // pred_region
      %55 = dma.done [#allocation6], 4096
    $region25: #{tpu_custom_call.1} parent=1 // pred_fallthru
      _
    // Predicated region
    $region26: #{tpu_custom_call.1} parent=1 // pred_check
      _
    $region27: #{tpu_custom_call.1} parent=1 // pred_check_branch
      %57 = sbr.rel (0) target = $region29
    $region28: #{tpu_custom_call.1} parent=1 // pred_region
      %58 = dma.done [#allocation6], 2048
    $region29: #{tpu_custom_call.1} parent=1 // pred_fallthru
      _
    %v59 = vld [vmem:[#allocation2] sm:$0xff]
    %v60 = vld [vmem:[#allocation2 + $0x8] sm:$0xff]
    %v61 = vld [vmem:[#allocation2 + $0x10] sm:$0xff]
    %v62 = vld [vmem:[#allocation2 + $0x18] sm:$0xff]
    %v63 = vld [vmem:[#allocation2 + $0x20] sm:$0xff]
    %v64 = vld [vmem:[#allocation2 + $0x28] sm:$0xff]
    %v65 = vld [vmem:[#allocation2 + $0x30] sm:$0xff]
    %v66 = vld [vmem:[#allocation2 + $0x38] sm:$0xff]
    %v67 = vld [vmem:[#allocation2 + $0x40] sm:$0xff]
    %v68 = vld [vmem:[#allocation2 + $0x48] sm:$0xff]
    %v69 = vld [vmem:[#allocation2 + $0x50] sm:$0xff]
    %v70 = vld [vmem:[#allocation2 + $0x58] sm:$0xff]
    %v71 = vld [vmem:[#allocation2 + $0x60] sm:$0xff]
    %v72 = vld [vmem:[#allocation2 + $0x68] sm:$0xff]
    %v73 = vld [vmem:[#allocation2 + $0x70] sm:$0xff]
    %v74 = vld [vmem:[#allocation2 + $0x78] sm:$0xff]
    %v75 = vld [vmem:[#allocation2 + $0x80] sm:$0xff]
    %v76 = vld [vmem:[#allocation2 + $0x88] sm:$0xff]
    %v77 = vld [vmem:[#allocation2 + $0x90] sm:$0xff]
    %v78 = vld [vmem:[#allocation2 + $0x98] sm:$0xff]
    %v79 = vld [vmem:[#allocation2 + $0xa0] sm:$0xff]
    %v80 = vld [vmem:[#allocation2 + $0xa8] sm:$0xff]
    %v81 = vld [vmem:[#allocation2 + $0xb0] sm:$0xff]
    %v82 = vld [vmem:[#allocation2 + $0xb8] sm:$0xff]
    %v83 = vld [vmem:[#allocation2 + $0xc0] sm:$0xff]
    %v84 = vld [vmem:[#allocation2 + $0xc8] sm:$0xff]
    %v85 = vld [vmem:[#allocation2 + $0xd0] sm:$0xff]
    %v86 = vld [vmem:[#allocation2 + $0xd8] sm:$0xff]
    %v87 = vld [vmem:[#allocation2 + $0xe0] sm:$0xff]
    %v88 = vld [vmem:[#allocation2 + $0xe8] sm:$0xff]
    %v89 = vld [vmem:[#allocation2 + $0xf0] sm:$0xff]
    %v90 = vld [vmem:[#allocation2 + $0xf8] sm:$0xff]
    %v91 = vld [vmem:[#allocation5] sm:$0xff]
    %v92 = vld [vmem:[#allocation5 + $0x8] sm:$0xff]
    %v93 = vld [vmem:[#allocation5 + $0x10] sm:$0xff]
    %v94 = vld [vmem:[#allocation5 + $0x18] sm:$0xff]
    %v95 = vld [vmem:[#allocation5 + $0x20] sm:$0xff]
    %v96 = vld [vmem:[#allocation5 + $0x28] sm:$0xff]
    %v97 = vld [vmem:[#allocation5 + $0x30] sm:$0xff]
    %v98 = vld [vmem:[#allocation5 + $0x38] sm:$0xff]
    %v99 = vld [vmem:[#allocation5 + $0x40] sm:$0xff]
    %v100 = vld [vmem:[#allocation5 + $0x48] sm:$0xff]
    %v101 = vld [vmem:[#allocation5 + $0x50] sm:$0xff]
    %v102 = vld [vmem:[#allocation5 + $0x58] sm:$0xff]
    %v103 = vld [vmem:[#allocation5 + $0x60] sm:$0xff]
    %v104 = vld [vmem:[#allocation5 + $0x68] sm:$0xff]
    %v105 = vld [vmem:[#allocation5 + $0x70] sm:$0xff]
    %v106 = vld [vmem:[#allocation5 + $0x78] sm:$0xff]
    %v107 = vld [vmem:[#allocation5 + $0x80] sm:$0xff]
    %v108 = vld [vmem:[#allocation5 + $0x88] sm:$0xff]
    %v109 = vld [vmem:[#allocation5 + $0x90] sm:$0xff]
    %v110 = vld [vmem:[#allocation5 + $0x98] sm:$0xff]
    %v111 = vld [vmem:[#allocation5 + $0xa0] sm:$0xff]
    %v112 = vld [vmem:[#allocation5 + $0xa8] sm:$0xff]
    %v113 = vld [vmem:[#allocation5 + $0xb0] sm:$0xff]
    %v114 = vld [vmem:[#allocation5 + $0xb8] sm:$0xff]
    %v115 = vld [vmem:[#allocation5 + $0xc0] sm:$0xff]
    %v116 = vld [vmem:[#allocation5 + $0xc8] sm:$0xff]
    %v117 = vld [vmem:[#allocation5 + $0xd0] sm:$0xff]
    %v118 = vld [vmem:[#allocation5 + $0xd8] sm:$0xff]
    %v119 = vld [vmem:[#allocation5 + $0xe0] sm:$0xff]
    %v120 = vld [vmem:[#allocation5 + $0xe8] sm:$0xff]
    %v121 = vld [vmem:[#allocation5 + $0xf0] sm:$0xff]
    %v122 = vld [vmem:[#allocation5 + $0xf8] sm:$0xff]
    %v123 = vld [vmem:[#allocation7] sm:$0xff]
    %v124 = vld [vmem:[#allocation7 + $0x8] sm:$0xff]
    %v125 = vld [vmem:[#allocation7 + $0x10] sm:$0xff]
    %v126 = vld [vmem:[#allocation7 + $0x18] sm:$0xff]
    %v127 = vld [vmem:[#allocation7 + $0x20] sm:$0xff]
    %v128 = vld [vmem:[#allocation7 + $0x28] sm:$0xff]
    %v129 = vld [vmem:[#allocation7 + $0x30] sm:$0xff]
    %v130 = vld [vmem:[#allocation7 + $0x38] sm:$0xff]
    %v131 = vld [vmem:[#allocation7 + $0x40] sm:$0xff]
    %v132 = vld [vmem:[#allocation7 + $0x48] sm:$0xff]
    %v133 = vld [vmem:[#allocation7 + $0x50] sm:$0xff]
    %v134 = vld [vmem:[#allocation7 + $0x58] sm:$0xff]
    %v135 = vld [vmem:[#allocation7 + $0x60] sm:$0xff]
    %v136 = vld [vmem:[#allocation7 + $0x68] sm:$0xff]
    %v137 = vld [vmem:[#allocation7 + $0x70] sm:$0xff]
    %v138 = vld [vmem:[#allocation7 + $0x78] sm:$0xff]
    %v139 = vld [vmem:[%s3] sm:$0x1]
    %140 = vadd.xlane.f32.xlu0 %v59
    %v141 = vpop.xlane.xlu0 %140
    %142 = vadd.xlane.f32.xlu0 %v60
    %v143 = vpop.xlane.xlu0 %142
    %144 = vadd.xlane.f32.xlu0 %v61
    %v145 = vpop.xlane.xlu0 %144
    %146 = vadd.xlane.f32.xlu0 %v62
    %v147 = vpop.xlane.xlu0 %146
    %148 = vadd.xlane.f32.xlu0 %v63
    %v149 = vpop.xlane.xlu0 %148
    %150 = vadd.xlane.f32.xlu0 %v64
    %v151 = vpop.xlane.xlu0 %150
    %152 = vadd.xlane.f32.xlu0 %v65
    %v153 = vpop.xlane.xlu0 %152
    %154 = vadd.xlane.f32.xlu0 %v66
    %v155 = vpop.xlane.xlu0 %154
    %156 = vadd.xlane.f32.xlu0 %v67
    %v157 = vpop.xlane.xlu0 %156
    %158 = vadd.xlane.f32.xlu0 %v68
    %v159 = vpop.xlane.xlu0 %158
    %160 = vadd.xlane.f32.xlu0 %v69
    %v161 = vpop.xlane.xlu0 %160
    %162 = vadd.xlane.f32.xlu0 %v70
    %v163 = vpop.xlane.xlu0 %162
    %164 = vadd.xlane.f32.xlu0 %v71
    %v165 = vpop.xlane.xlu0 %164
    %166 = vadd.xlane.f32.xlu0 %v72
    %v167 = vpop.xlane.xlu0 %166
    %168 = vadd.xlane.f32.xlu0 %v73
    %v169 = vpop.xlane.xlu0 %168
    %170 = vadd.xlane.f32.xlu0 %v74
    %v171 = vpop.xlane.xlu0 %170
    %172 = vadd.xlane.f32.xlu0 %v75
    %v173 = vpop.xlane.xlu0 %172
    %174 = vadd.xlane.f32.xlu0 %v76
    %v175 = vpop.xlane.xlu0 %174
    %176 = vadd.xlane.f32.xlu0 %v77
    %v177 = vpop.xlane.xlu0 %176
    %178 = vadd.xlane.f32.xlu0 %v78
    %v179 = vpop.xlane.xlu0 %178
    %180 = vadd.xlane.f32.xlu0 %v79
    %v181 = vpop.xlane.xlu0 %180
    %182 = vadd.xlane.f32.xlu0 %v80
    %v183 = vpop.xlane.xlu0 %182
    %184 = vadd.xlane.f32.xlu0 %v81
    %v185 = vpop.xlane.xlu0 %184
    %186 = vadd.xlane.f32.xlu0 %v82
    %v187 = vpop.xlane.xlu0 %186
    %188 = vadd.xlane.f32.xlu0 %v83
    %v189 = vpop.xlane.xlu0 %188
    %190 = vadd.xlane.f32.xlu0 %v84
    %v191 = vpop.xlane.xlu0 %190
    %192 = vadd.xlane.f32.xlu0 %v85
    %v193 = vpop.xlane.xlu0 %192
    %194 = vadd.xlane.f32.xlu0 %v86
    %v195 = vpop.xlane.xlu0 %194
    %196 = vadd.xlane.f32.xlu0 %v87
    %v197 = vpop.xlane.xlu0 %196
    %198 = vadd.xlane.f32.xlu0 %v88
    %v199 = vpop.xlane.xlu0 %198
    %200 = vadd.xlane.f32.xlu0 %v89
    %v201 = vpop.xlane.xlu0 %200
    %202 = vadd.xlane.f32.xlu0 %v90
    %v203 = vpop.xlane.xlu0 %202
    %v204 = vadd.f32 %v141, 1.0
    %v205 = vadd.f32 %v143, 1.0
    %v206 = vadd.f32 %v145, 1.0
    %v207 = vadd.f32 %v147, 1.0
    %v208 = vadd.f32 %v149, 1.0
    %v209 = vadd.f32 %v151, 1.0
    %v210 = vadd.f32 %v153, 1.0
    %v211 = vadd.f32 %v155, 1.0
    %v212 = vadd.f32 %v157, 1.0
    %v213 = vadd.f32 %v159, 1.0
    %v214 = vadd.f32 %v161, 1.0
    %v215 = vadd.f32 %v163, 1.0
    %v216 = vadd.f32 %v165, 1.0
    %v217 = vadd.f32 %v167, 1.0
    %v218 = vadd.f32 %v169, 1.0
    %v219 = vadd.f32 %v171, 1.0
    %v220 = vadd.f32 %v173, 1.0
    %v221 = vadd.f32 %v175, 1.0
    %v222 = vadd.f32 %v177, 1.0
    %v223 = vadd.f32 %v179, 1.0
    %v224 = vadd.f32 %v181, 1.0
    %v225 = vadd.f32 %v183, 1.0
    %v226 = vadd.f32 %v185, 1.0
    %v227 = vadd.f32 %v187, 1.0
    %v228 = vadd.f32 %v189, 1.0
    %v229 = vadd.f32 %v191, 1.0
    %v230 = vadd.f32 %v193, 1.0
    %v231 = vadd.f32 %v195, 1.0
    %v232 = vadd.f32 %v197, 1.0
    %v233 = vadd.f32 %v199, 1.0
    %v234 = vadd.f32 %v201, 1.0
    %v235 = vadd.f32 %v203, 1.0
    %v236 = vrcp.pop %v204
    %v237 = vrcp.pop %v205
    %v238 = vrcp.pop %v206
    %v239 = vrcp.pop %v207
    %v240 = vrcp.pop %v208
    %v241 = vrcp.pop %v209
    %v242 = vrcp.pop %v210
    %v243 = vrcp.pop %v211
    %v244 = vrcp.pop %v212
    %v245 = vrcp.pop %v213
    %v246 = vrcp.pop %v214
    %v247 = vrcp.pop %v215
    %v248 = vrcp.pop %v216
    %v249 = vrcp.pop %v217
    %v250 = vrcp.pop %v218
    %v251 = vrcp.pop %v219
    %v252 = vrcp.pop %v220
    %v253 = vrcp.pop %v221
    %v254 = vrcp.pop %v222
    %v255 = vrcp.pop %v223
    %v256 = vrcp.pop %v224
    %v257 = vrcp.pop %v225
    %v258 = vrcp.pop %v226
    %v259 = vrcp.pop %v227
    %v260 = vrcp.pop %v228
    %v261 = vrcp.pop %v229
    %v262 = vrcp.pop %v230
    %v263 = vrcp.pop %v231
    %v264 = vrcp.pop %v232
    %v265 = vrcp.pop %v233
    %v266 = vrcp.pop %v234
    %v267 = vrcp.pop %v235
    %268 = vmatprep.subr.mxu0 0.0
    %269 = vmatpush1.msra.mxu0 %v91
    %270 = vmatprep.subr.mxu0 0.0
    %271 = vmatpush1.msra.mxu0 %v92
    %272 = vmatprep.subr.mxu0 0.0
    %273 = vmatpush1.msra.mxu0 %v93
    %274 = vmatprep.subr.mxu0 0.0
    %275 = vmatpush1.msra.mxu0 %v94
    %276 = vmatprep.subr.mxu0 0.0
    %277 = vmatpush1.msra.mxu0 %v95
    %278 = vmatprep.subr.mxu0 0.0
    %279 = vmatpush1.msra.mxu0 %v96
    %280 = vmatprep.subr.mxu0 0.0
    %281 = vmatpush1.msra.mxu0 %v97
    %282 = vmatprep.subr.mxu0 0.0
    %283 = vmatpush1.msra.mxu0 %v98
    %284 = vmatprep.subr.mxu0 0.0
    %285 = vmatpush1.msra.mxu0 %v99
    %286 = vmatprep.subr.mxu0 0.0
    %287 = vmatpush1.msra.mxu0 %v100
    %288 = vmatprep.subr.mxu0 0.0
    %289 = vmatpush1.msra.mxu0 %v101
    %290 = vmatprep.subr.mxu0 0.0
    %291 = vmatpush1.msra.mxu0 %v102
    %292 = vmatprep.subr.mxu0 0.0
    %293 = vmatpush1.msra.mxu0 %v103
    %294 = vmatprep.subr.mxu0 0.0
    %295 = vmatpush1.msra.mxu0 %v104
    %296 = vmatprep.subr.mxu0 0.0
    %297 = vmatpush1.msra.mxu0 %v105
    %298 = vmatprep.subr.mxu0 0.0
    %299 = vmatpush1.msra.mxu0 %v106
    %300 = vmatprep.subr.mxu0 0.0
    %301 = vmatpush1.msra.mxu0 0.0
    %302 = vmatprep.subr.mxu0 0.0
    %303 = vmatpush1.msra.mxu0 0.0
    %304 = vmatprep.subr.mxu0 0.0
    %305 = vmatpush1.msra.mxu0 0.0
    %306 = vmatprep.subr.mxu0 0.0
    %307 = vmatpush1.msra.mxu0 0.0
    %308 = vmatprep.subr.mxu0 0.0
    %309 = vmatpush1.msra.mxu0 0.0
    %310 = vmatprep.subr.mxu0 0.0
    %311 = vmatpush1.msra.mxu0 0.0
    %312 = vmatprep.subr.mxu0 0.0
    %313 = vmatpush1.msra.mxu0 0.0
    %314 = vmatprep.subr.mxu0 0.0
    %315 = vmatpush1.msra.mxu0 0.0
    %316 = vmatprep.subr.mxu0 0.0
    %317 = vmatpush1.msra.mxu0 0.0
    %318 = vmatprep.subr.mxu0 0.0
    %319 = vmatpush1.msra.mxu0 0.0
    %320 = vmatprep.subr.mxu0 0.0
    %321 = vmatpush1.msra.mxu0 0.0
    %322 = vmatprep.subr.mxu0 0.0
    %323 = vmatpush1.msra.mxu0 0.0
    %324 = vmatprep.subr.mxu0 0.0
    %325 = vmatpush1.msra.mxu0 0.0
    %326 = vmatprep.subr.mxu0 0.0
    %327 = vmatpush1.msra.mxu0 0.0
    %328 = vmatprep.subr.mxu0 0.0
    %329 = vmatpush1.msra.mxu0 0.0
    %330 = vmatprep.subr.mxu0 0.0
    %331 = vmatpush1.msra.mxu0 0.0
    %332 = vmatprep.mubr.f32.mxu0 0.0
    %333 = vmatmul.mubr.f32.gmra.mrb[0].mxu0 %v59
    %v334 = vpop.f32.mrb[0].mxu0
    %v335 = vadd.f32 0.0, %v334
    %v336 = vpop.f32.mrb[0].mxu0
    %337 = vmatprep.mubr.f32.mxu0 0.0
    %338 = vmatmul.mubr.f32.gmra.mrb[0].mxu0 %v60
    %v339 = vpop.f32.mrb[0].mxu0
    %v340 = vadd.f32 0.0, %v339
    %v341 = vpop.f32.mrb[0].mxu0
    %342 = vmatprep.mubr.f32.mxu0 0.0
    %343 = vmatmul.mubr.f32.gmra.mrb[0].mxu0 %v61
    %v344 = vpop.f32.mrb[0].mxu0
    %v345 = vadd.f32 0.0, %v344
    %v346 = vpop.f32.mrb[0].mxu0
    %347 = vmatprep.mubr.f32.mxu0 0.0
    %348 = vmatmul.mubr.f32.gmra.mrb[0].mxu0 %v62
    %v349 = vpop.f32.mrb[0].mxu0
    %v350 = vadd.f32 0.0, %v349
    %v351 = vpop.f32.mrb[0].mxu0
    %352 = vmatprep.mubr.f32.mxu0 0.0
    %353 = vmatmul.mubr.f32.gmra.mrb[0].mxu0 %v63
    %v354 = vpop.f32.mrb[0].mxu0
    %v355 = vadd.f32 0.0, %v354
    %v356 = vpop.f32.mrb[0].mxu0
    %357 = vmatprep.mubr.f32.mxu0 0.0
    %358 = vmatmul.mubr.f32.gmra.mrb[0].mxu0 %v64
    %v359 = vpop.f32.mrb[0].mxu0
    %v360 = vadd.f32 0.0, %v359
    %v361 = vpop.f32.mrb[0].mxu0
    %362 = vmatprep.mubr.f32.mxu0 0.0
    %363 = vmatmul.mubr.f32.gmra.mrb[0].mxu0 %v65
    %v364 = vpop.f32.mrb[0].mxu0
    %v365 = vadd.f32 0.0, %v364
    %v366 = vpop.f32.mrb[0].mxu0
    %367 = vmatprep.mubr.f32.mxu0 0.0
    %368 = vmatmul.mubr.f32.gmra.mrb[0].mxu0 %v66
    %v369 = vpop.f32.mrb[0].mxu0
    %v370 = vadd.f32 0.0, %v369
    %v371 = vpop.f32.mrb[0].mxu0
    %372 = vmatprep.mubr.f32.mxu0 0.0
    %373 = vmatmul.mubr.f32.gmra.mrb[0].mxu0 %v67
    %v374 = vpop.f32.mrb[0].mxu0
    %v375 = vadd.f32 0.0, %v374
    %v376 = vpop.f32.mrb[0].mxu0
    %377 = vmatprep.mubr.f32.mxu0 0.0
    %378 = vmatmul.mubr.f32.gmra.mrb[0].mxu0 %v68
    %v379 = vpop.f32.mrb[0].mxu0
    %v380 = vadd.f32 0.0, %v379
    %v381 = vpop.f32.mrb[0].mxu0
    %382 = vmatprep.mubr.f32.mxu0 0.0
    %383 = vmatmul.mubr.f32.gmra.mrb[0].mxu0 %v69
    %v384 = vpop.f32.mrb[0].mxu0
    %v385 = vadd.f32 0.0, %v384
    %v386 = vpop.f32.mrb[0].mxu0
    %387 = vmatprep.mubr.f32.mxu0 0.0
    %388 = vmatmul.mubr.f32.gmra.mrb[0].mxu0 %v70
    %v389 = vpop.f32.mrb[0].mxu0
    %v390 = vadd.f32 0.0, %v389
    %v391 = vpop.f32.mrb[0].mxu0
    %392 = vmatprep.mubr.f32.mxu0 0.0
    %393 = vmatmul.mubr.f32.gmra.mrb[0].mxu0 %v71
    %v394 = vpop.f32.mrb[0].mxu0
    %v395 = vadd.f32 0.0, %v394
    %v396 = vpop.f32.mrb[0].mxu0
    %397 = vmatprep.mubr.f32.mxu0 0.0
    %398 = vmatmul.mubr.f32.gmra.mrb[0].mxu0 %v72
    %v399 = vpop.f32.mrb[0].mxu0
    %v400 = vadd.f32 0.0, %v399
    %v401 = vpop.f32.mrb[0].mxu0
    %402 = vmatprep.mubr.f32.mxu0 0.0
    %403 = vmatmul.mubr.f32.gmra.mrb[0].mxu0 %v73
    %v404 = vpop.f32.mrb[0].mxu0
    %v405 = vadd.f32 0.0, %v404
    %v406 = vpop.f32.mrb[0].mxu0
    %407 = vmatprep.mubr.f32.mxu0 0.0
    %408 = vmatmul.mubr.f32.gmra.mrb[0].mxu0 %v74
    %v409 = vpop.f32.mrb[0].mxu0
    %v410 = vadd.f32 0.0, %v409
    %v411 = vpop.f32.mrb[0].mxu0
    %412 = vdwg.mxu0
    %413 = vmatprep.subr.mxu0 0.0
    %414 = vmatpush1.msra.mxu0 %v107
    %415 = vmatprep.subr.mxu0 0.0
    %416 = vmatpush1.msra.mxu0 %v108
    %417 = vmatprep.subr.mxu0 0.0
    %418 = vmatpush1.msra.mxu0 %v109
    %419 = vmatprep.subr.mxu0 0.0
    %420 = vmatpush1.msra.mxu0 %v110
    %421 = vmatprep.subr.mxu0 0.0
    %422 = vmatpush1.msra.mxu0 %v111
    %423 = vmatprep.subr.mxu0 0.0
    %424 = vmatpush1.msra.mxu0 %v112
    %425 = vmatprep.subr.mxu0 0.0
    %426 = vmatpush1.msra.mxu0 %v113
    %427 = vmatprep.subr.mxu0 0.0
    %428 = vmatpush1.msra.mxu0 %v114
    %429 = vmatprep.subr.mxu0 0.0
    %430 = vmatpush1.msra.mxu0 %v115
    %431 = vmatprep.subr.mxu0 0.0
    %432 = vmatpush1.msra.mxu0 %v116
    %433 = vmatprep.subr.mxu0 0.0
    %434 = vmatpush1.msra.mxu0 %v117
    %435 = vmatprep.subr.mxu0 0.0
    %436 = vmatpush1.msra.mxu0 %v118
    %437 = vmatprep.subr.mxu0 0.0
    %438 = vmatpush1.msra.mxu0 %v119
    %439 = vmatprep.subr.mxu0 0.0
    %440 = vmatpush1.msra.mxu0 %v120
    %441 = vmatprep.subr.mxu0 0.0
    %442 = vmatpush1.msra.mxu0 %v121
    %443 = vmatprep.subr.mxu0 0.0
    %444 = vmatpush1.msra.mxu0 %v122
    %445 = vmatprep.subr.mxu0 0.0
    %446 = vmatpush1.msra.mxu0 0.0
    %447 = vmatprep.subr.mxu0 0.0
    %448 = vmatpush1.msra.mxu0 0.0
    %449 = vmatprep.subr.mxu0 0.0
    %450 = vmatpush1.msra.mxu0 0.0
    %451 = vmatprep.subr.mxu0 0.0
    %452 = vmatpush1.msra.mxu0 0.0
    %453 = vmatprep.subr.mxu0 0.0
    %454 = vmatpush1.msra.mxu0 0.0
    %455 = vmatprep.subr.mxu0 0.0
    %456 = vmatpush1.msra.mxu0 0.0
    %457 = vmatprep.subr.mxu0 0.0
    %458 = vmatpush1.msra.mxu0 0.0
    %459 = vmatprep.subr.mxu0 0.0
    %460 = vmatpush1.msra.mxu0 0.0
    %461 = vmatprep.subr.mxu0 0.0
    %462 = vmatpush1.msra.mxu0 0.0
    %463 = vmatprep.subr.mxu0 0.0
    %464 = vmatpush1.msra.mxu0 0.0
    %465 = vmatprep.subr.mxu0 0.0
    %466 = vmatpush1.msra.mxu0 0.0
    %467 = vmatprep.subr.mxu0 0.0
    %468 = vmatpush1.msra.mxu0 0.0
    %469 = vmatprep.subr.mxu0 0.0
    %470 = vmatpush1.msra.mxu0 0.0
    %471 = vmatprep.subr.mxu0 0.0
    %472 = vmatpush1.msra.mxu0 0.0
    %473 = vmatprep.subr.mxu0 0.0
    %474 = vmatpush1.msra.mxu0 0.0
    %475 = vmatprep.subr.mxu0 0.0
    %476 = vmatpush1.msra.mxu0 0.0
    %477 = vmatprep.mubr.f32.mxu0 0.0
    %478 = vmatmul.mubr.f32.gmra.mrb[0].mxu0 %v75
    %v479 = vpop.f32.mrb[0].mxu0
    %v480 = vadd.f32 0.0, %v479
    %v481 = vpop.f32.mrb[0].mxu0
    %482 = vmatprep.mubr.f32.mxu0 0.0
    %483 = vmatmul.mubr.f32.gmra.mrb[0].mxu0 %v76
    %v484 = vpop.f32.mrb[0].mxu0
    %v485 = vadd.f32 0.0, %v484
    %v486 = vpop.f32.mrb[0].mxu0
    %487 = vmatprep.mubr.f32.mxu0 0.0
    %488 = vmatmul.mubr.f32.gmra.mrb[0].mxu0 %v77
    %v489 = vpop.f32.mrb[0].mxu0
    %v490 = vadd.f32 0.0, %v489
    %v491 = vpop.f32.mrb[0].mxu0
    %492 = vmatprep.mubr.f32.mxu0 0.0
    %493 = vmatmul.mubr.f32.gmra.mrb[0].mxu0 %v78
    %v494 = vpop.f32.mrb[0].mxu0
    %v495 = vadd.f32 0.0, %v494
    %v496 = vpop.f32.mrb[0].mxu0
    %497 = vmatprep.mubr.f32.mxu0 0.0
    %498 = vmatmul.mubr.f32.gmra.mrb[0].mxu0 %v79
    %v499 = vpop.f32.mrb[0].mxu0
    %v500 = vadd.f32 0.0, %v499
    %v501 = vpop.f32.mrb[0].mxu0
    %502 = vmatprep.mubr.f32.mxu0 0.0
    %503 = vmatmul.mubr.f32.gmra.mrb[0].mxu0 %v80
    %v504 = vpop.f32.mrb[0].mxu0
    %v505 = vadd.f32 0.0, %v504
    %v506 = vpop.f32.mrb[0].mxu0
    %507 = vmatprep.mubr.f32.mxu0 0.0
    %508 = vmatmul.mubr.f32.gmra.mrb[0].mxu0 %v81
    %v509 = vpop.f32.mrb[0].mxu0
    %v510 = vadd.f32 0.0, %v509
    %v511 = vpop.f32.mrb[0].mxu0
    %512 = vmatprep.mubr.f32.mxu0 0.0
    %513 = vmatmul.mubr.f32.gmra.mrb[0].mxu0 %v82
    %v514 = vpop.f32.mrb[0].mxu0
    %v515 = vadd.f32 0.0, %v514
    %v516 = vpop.f32.mrb[0].mxu0
    %517 = vmatprep.mubr.f32.mxu0 0.0
    %518 = vmatmul.mubr.f32.gmra.mrb[0].mxu0 %v83
    %v519 = vpop.f32.mrb[0].mxu0
    %v520 = vadd.f32 0.0, %v519
    %v521 = vpop.f32.mrb[0].mxu0
    %522 = vmatprep.mubr.f32.mxu0 0.0
    %523 = vmatmul.mubr.f32.gmra.mrb[0].mxu0 %v84
    %v524 = vpop.f32.mrb[0].mxu0
    %v525 = vadd.f32 0.0, %v524
    %v526 = vpop.f32.mrb[0].mxu0
    %527 = vmatprep.mubr.f32.mxu0 0.0
    %528 = vmatmul.mubr.f32.gmra.mrb[0].mxu0 %v85
    %v529 = vpop.f32.mrb[0].mxu0
    %v530 = vadd.f32 0.0, %v529
    %v531 = vpop.f32.mrb[0].mxu0
    %532 = vmatprep.mubr.f32.mxu0 0.0
    %533 = vmatmul.mubr.f32.gmra.mrb[0].mxu0 %v86
    %v534 = vpop.f32.mrb[0].mxu0
    %v535 = vadd.f32 0.0, %v534
    %v536 = vpop.f32.mrb[0].mxu0
    %537 = vmatprep.mubr.f32.mxu0 0.0
    %538 = vmatmul.mubr.f32.gmra.mrb[0].mxu0 %v87
    %v539 = vpop.f32.mrb[0].mxu0
    %v540 = vadd.f32 0.0, %v539
    %v541 = vpop.f32.mrb[0].mxu0
    %542 = vmatprep.mubr.f32.mxu0 0.0
    %543 = vmatmul.mubr.f32.gmra.mrb[0].mxu0 %v88
    %v544 = vpop.f32.mrb[0].mxu0
    %v545 = vadd.f32 0.0, %v544
    %v546 = vpop.f32.mrb[0].mxu0
    %547 = vmatprep.mubr.f32.mxu0 0.0
    %548 = vmatmul.mubr.f32.gmra.mrb[0].mxu0 %v89
    %v549 = vpop.f32.mrb[0].mxu0
    %v550 = vadd.f32 0.0, %v549
    %v551 = vpop.f32.mrb[0].mxu0
    %552 = vmatprep.mubr.f32.mxu0 0.0
    %553 = vmatmul.mubr.f32.gmra.mrb[0].mxu0 %v90
    %v554 = vpop.f32.mrb[0].mxu0
    %v555 = vadd.f32 0.0, %v554
    %v556 = vpop.f32.mrb[0].mxu0
    %557 = vdwg.mxu0
    %v559 = vlaneseq
    %v560 = vshrl.u32 %v559, 7
    %v561 = vsub.s32 0, %v560
    %v562 = vrot.slane %v139, %v561
    %564 = vmatprep.subr.mxu0 0.0
    %565 = vmatpush1.msra.mxu0 %v123
    %566 = vmatprep.subr.mxu0 0.0
    %567 = vmatpush1.msra.mxu0 %v124
    %568 = vmatprep.subr.mxu0 0.0
    %569 = vmatpush1.msra.mxu0 %v125
    %570 = vmatprep.subr.mxu0 0.0
    %571 = vmatpush1.msra.mxu0 %v126
    %572 = vmatprep.subr.mxu0 0.0
    %573 = vmatpush1.msra.mxu0 %v127
    %574 = vmatprep.subr.mxu0 0.0
    %575 = vmatpush1.msra.mxu0 %v128
    %576 = vmatprep.subr.mxu0 0.0
    %577 = vmatpush1.msra.mxu0 %v129
    %578 = vmatprep.subr.mxu0 0.0
    %579 = vmatpush1.msra.mxu0 %v130
    %580 = vmatprep.subr.mxu0 0.0
    %581 = vmatpush1.msra.mxu0 %v131
    %582 = vmatprep.subr.mxu0 0.0
    %583 = vmatpush1.msra.mxu0 %v132
    %584 = vmatprep.subr.mxu0 0.0
    %585 = vmatpush1.msra.mxu0 %v133
    %586 = vmatprep.subr.mxu0 0.0
    %587 = vmatpush1.msra.mxu0 %v134
    %588 = vmatprep.subr.mxu0 0.0
    %589 = vmatpush1.msra.mxu0 %v135
    %590 = vmatprep.subr.mxu0 0.0
    %591 = vmatpush1.msra.mxu0 %v136
    %592 = vmatprep.subr.mxu0 0.0
    %593 = vmatpush1.msra.mxu0 %v137
    %594 = vmatprep.subr.mxu0 0.0
    %595 = vmatpush1.msra.mxu0 %v138
    %596 = vmatprep.subr.mxu0 0.0
    %597 = vmatpush1.msra.mxu0 0.0
    %598 = vmatprep.subr.mxu0 0.0
    %599 = vmatpush1.msra.mxu0 0.0
    %600 = vmatprep.subr.mxu0 0.0
    %601 = vmatpush1.msra.mxu0 0.0
    %602 = vmatprep.subr.mxu0 0.0
    %603 = vmatpush1.msra.mxu0 0.0
    %604 = vmatprep.subr.mxu0 0.0
    %605 = vmatpush1.msra.mxu0 0.0
    %606 = vmatprep.subr.mxu0 0.0
    %607 = vmatpush1.msra.mxu0 0.0
    %608 = vmatprep.subr.mxu0 0.0
    %609 = vmatpush1.msra.mxu0 0.0
    %610 = vmatprep.subr.mxu0 0.0
    %611 = vmatpush1.msra.mxu0 0.0
    %612 = vmatprep.subr.mxu0 0.0
    %613 = vmatpush1.msra.mxu0 0.0
    %614 = vmatprep.subr.mxu0 0.0
    %615 = vmatpush1.msra.mxu0 0.0
    %616 = vmatprep.subr.mxu0 0.0
    %617 = vmatpush1.msra.mxu0 0.0
    %618 = vmatprep.subr.mxu0 0.0
    %619 = vmatpush1.msra.mxu0 0.0
    %620 = vmatprep.subr.mxu0 0.0
    %621 = vmatpush1.msra.mxu0 0.0
    %622 = vmatprep.subr.mxu0 0.0
    %623 = vmatpush1.msra.mxu0 0.0
    %624 = vmatprep.subr.mxu0 0.0
    %625 = vmatpush1.msra.mxu0 0.0
    %626 = vmatprep.subr.mxu0 0.0
    %627 = vmatpush1.msra.mxu0 0.0
    %628 = vmatprep.mubr.f32.mxu0 0.0
    %629 = vmatmul.mubr.f32.gmra.mrb[0].mxu0 %v335
    %v630 = vpop.f32.mrb[0].mxu0
    %v631 = vadd.f32 %v562, %v630
    %v632 = vpop.f32.mrb[0].mxu0
    %633 = vmatprep.mubr.f32.mxu0 0.0
    %634 = vmatmul.mubr.f32.gmra.mrb[0].mxu0 %v340
    %v635 = vpop.f32.mrb[0].mxu0
    %v636 = vadd.f32 %v562, %v635
    %v637 = vpop.f32.mrb[0].mxu0
    %638 = vmatprep.mubr.f32.mxu0 0.0
    %639 = vmatmul.mubr.f32.gmra.mrb[0].mxu0 %v345
    %v640 = vpop.f32.mrb[0].mxu0
    %v641 = vadd.f32 %v562, %v640
    %v642 = vpop.f32.mrb[0].mxu0
    %643 = vmatprep.mubr.f32.mxu0 0.0
    %644 = vmatmul.mubr.f32.gmra.mrb[0].mxu0 %v350
    %v645 = vpop.f32.mrb[0].mxu0
    %v646 = vadd.f32 %v562, %v645
    %v647 = vpop.f32.mrb[0].mxu0
    %648 = vmatprep.mubr.f32.mxu0 0.0
    %649 = vmatmul.mubr.f32.gmra.mrb[0].mxu0 %v355
    %v650 = vpop.f32.mrb[0].mxu0
    %v651 = vadd.f32 %v562, %v650
    %v652 = vpop.f32.mrb[0].mxu0
    %653 = vmatprep.mubr.f32.mxu0 0.0
    %654 = vmatmul.mubr.f32.gmra.mrb[0].mxu0 %v360
    %v655 = vpop.f32.mrb[0].mxu0
    %v656 = vadd.f32 %v562, %v655
    %v657 = vpop.f32.mrb[0].mxu0
    %658 = vmatprep.mubr.f32.mxu0 0.0
    %659 = vmatmul.mubr.f32.gmra.mrb[0].mxu0 %v365
    %v660 = vpop.f32.mrb[0].mxu0
    %v661 = vadd.f32 %v562, %v660
    %v662 = vpop.f32.mrb[0].mxu0
    %663 = vmatprep.mubr.f32.mxu0 0.0
    %664 = vmatmul.mubr.f32.gmra.mrb[0].mxu0 %v370
    %v665 = vpop.f32.mrb[0].mxu0
    %v666 = vadd.f32 %v562, %v665
    %v667 = vpop.f32.mrb[0].mxu0
    %668 = vmatprep.mubr.f32.mxu0 0.0
    %669 = vmatmul.mubr.f32.gmra.mrb[0].mxu0 %v375
    %v670 = vpop.f32.mrb[0].mxu0
    %v671 = vadd.f32 %v562, %v670
    %v672 = vpop.f32.mrb[0].mxu0
    %673 = vmatprep.mubr.f32.mxu0 0.0
    %674 = vmatmul.mubr.f32.gmra.mrb[0].mxu0 %v380
    %v675 = vpop.f32.mrb[0].mxu0
    %v676 = vadd.f32 %v562, %v675
    %v677 = vpop.f32.mrb[0].mxu0
    %678 = vmatprep.mubr.f32.mxu0 0.0
    %679 = vmatmul.mubr.f32.gmra.mrb[0].mxu0 %v385
    %v680 = vpop.f32.mrb[0].mxu0
    %v681 = vadd.f32 %v562, %v680
    %v682 = vpop.f32.mrb[0].mxu0
    %683 = vmatprep.mubr.f32.mxu0 0.0
    %684 = vmatmul.mubr.f32.gmra.mrb[0].mxu0 %v390
    %v685 = vpop.f32.mrb[0].mxu0
    %v686 = vadd.f32 %v562, %v685
    %v687 = vpop.f32.mrb[0].mxu0
    %688 = vmatprep.mubr.f32.mxu0 0.0
    %689 = vmatmul.mubr.f32.gmra.mrb[0].mxu0 %v395
    %v690 = vpop.f32.mrb[0].mxu0
    %v691 = vadd.f32 %v562, %v690
    %v692 = vpop.f32.mrb[0].mxu0
    %693 = vmatprep.mubr.f32.mxu0 0.0
    %694 = vmatmul.mubr.f32.gmra.mrb[0].mxu0 %v400
    %v695 = vpop.f32.mrb[0].mxu0
    %v696 = vadd.f32 %v562, %v695
    %v697 = vpop.f32.mrb[0].mxu0
    %698 = vmatprep.mubr.f32.mxu0 0.0
    %699 = vmatmul.mubr.f32.gmra.mrb[0].mxu0 %v405
    %v700 = vpop.f32.mrb[0].mxu0
    %v701 = vadd.f32 %v562, %v700
    %v702 = vpop.f32.mrb[0].mxu0
    %703 = vmatprep.mubr.f32.mxu0 0.0
    %704 = vmatmul.mubr.f32.gmra.mrb[0].mxu0 %v410
    %v705 = vpop.f32.mrb[0].mxu0
    %v706 = vadd.f32 %v562, %v705
    %v707 = vpop.f32.mrb[0].mxu0
    %708 = vmatprep.mubr.f32.mxu0 0.0
    %709 = vmatmul.mubr.f32.gmra.mrb[0].mxu0 %v480
    %v710 = vpop.f32.mrb[0].mxu0
    %v711 = vadd.f32 %v562, %v710
    %v712 = vpop.f32.mrb[0].mxu0
    %713 = vmatprep.mubr.f32.mxu0 0.0
    %714 = vmatmul.mubr.f32.gmra.mrb[0].mxu0 %v485
    %v715 = vpop.f32.mrb[0].mxu0
    %v716 = vadd.f32 %v562, %v715
    %v717 = vpop.f32.mrb[0].mxu0
    %718 = vmatprep.mubr.f32.mxu0 0.0
    %719 = vmatmul.mubr.f32.gmra.mrb[0].mxu0 %v490
    %v720 = vpop.f32.mrb[0].mxu0
    %v721 = vadd.f32 %v562, %v720
    %v722 = vpop.f32.mrb[0].mxu0
    %723 = vmatprep.mubr.f32.mxu0 0.0
    %724 = vmatmul.mubr.f32.gmra.mrb[0].mxu0 %v495
    %v725 = vpop.f32.mrb[0].mxu0
    %v726 = vadd.f32 %v562, %v725
    %v727 = vpop.f32.mrb[0].mxu0
    %728 = vmatprep.mubr.f32.mxu0 0.0
    %729 = vmatmul.mubr.f32.gmra.mrb[0].mxu0 %v500
    %v730 = vpop.f32.mrb[0].mxu0
    %v731 = vadd.f32 %v562, %v730
    %v732 = vpop.f32.mrb[0].mxu0
    %733 = vmatprep.mubr.f32.mxu0 0.0
    %734 = vmatmul.mubr.f32.gmra.mrb[0].mxu0 %v505
    %v735 = vpop.f32.mrb[0].mxu0
    %v736 = vadd.f32 %v562, %v735
    %v737 = vpop.f32.mrb[0].mxu0
    %738 = vmatprep.mubr.f32.mxu0 0.0
    %739 = vmatmul.mubr.f32.gmra.mrb[0].mxu0 %v510
    %v740 = vpop.f32.mrb[0].mxu0
    %v741 = vadd.f32 %v562, %v740
    %v742 = vpop.f32.mrb[0].mxu0
    %743 = vmatprep.mubr.f32.mxu0 0.0
    %744 = vmatmul.mubr.f32.gmra.mrb[0].mxu0 %v515
    %v745 = vpop.f32.mrb[0].mxu0
    %v746 = vadd.f32 %v562, %v745
    %v747 = vpop.f32.mrb[0].mxu0
    %748 = vmatprep.mubr.f32.mxu0 0.0
    %749 = vmatmul.mubr.f32.gmra.mrb[0].mxu0 %v520
    %v750 = vpop.f32.mrb[0].mxu0
    %v751 = vadd.f32 %v562, %v750
    %v752 = vpop.f32.mrb[0].mxu0
    %753 = vmatprep.mubr.f32.mxu0 0.0
    %754 = vmatmul.mubr.f32.gmra.mrb[0].mxu0 %v525
    %v755 = vpop.f32.mrb[0].mxu0
    %v756 = vadd.f32 %v562, %v755
    %v757 = vpop.f32.mrb[0].mxu0
    %758 = vmatprep.mubr.f32.mxu0 0.0
    %759 = vmatmul.mubr.f32.gmra.mrb[0].mxu0 %v530
    %v760 = vpop.f32.mrb[0].mxu0
    %v761 = vadd.f32 %v562, %v760
    %v762 = vpop.f32.mrb[0].mxu0
    %763 = vmatprep.mubr.f32.mxu0 0.0
    %764 = vmatmul.mubr.f32.gmra.mrb[0].mxu0 %v535
    %v765 = vpop.f32.mrb[0].mxu0
    %v766 = vadd.f32 %v562, %v765
    %v767 = vpop.f32.mrb[0].mxu0
    %768 = vmatprep.mubr.f32.mxu0 0.0
    %769 = vmatmul.mubr.f32.gmra.mrb[0].mxu0 %v540
    %v770 = vpop.f32.mrb[0].mxu0
    %v771 = vadd.f32 %v562, %v770
    %v772 = vpop.f32.mrb[0].mxu0
    %773 = vmatprep.mubr.f32.mxu0 0.0
    %774 = vmatmul.mubr.f32.gmra.mrb[0].mxu0 %v545
    %v775 = vpop.f32.mrb[0].mxu0
    %v776 = vadd.f32 %v562, %v775
    %v777 = vpop.f32.mrb[0].mxu0
    %778 = vmatprep.mubr.f32.mxu0 0.0
    %779 = vmatmul.mubr.f32.gmra.mrb[0].mxu0 %v550
    %v780 = vpop.f32.mrb[0].mxu0
    %v781 = vadd.f32 %v562, %v780
    %v782 = vpop.f32.mrb[0].mxu0
    %783 = vmatprep.mubr.f32.mxu0 0.0
    %784 = vmatmul.mubr.f32.gmra.mrb[0].mxu0 %v555
    %v785 = vpop.f32.mrb[0].mxu0
    %v786 = vadd.f32 %v562, %v785
    %v787 = vpop.f32.mrb[0].mxu0
    %788 = vdwg.mxu0
    %v789 = vmul.f32 %v631, %v236
    %v790 = vmul.f32 %v636, %v237
    %v791 = vmul.f32 %v641, %v238
    %v792 = vmul.f32 %v646, %v239
    %v793 = vmul.f32 %v651, %v240
    %v794 = vmul.f32 %v656, %v241
    %v795 = vmul.f32 %v661, %v242
    %v796 = vmul.f32 %v666, %v243
    %v797 = vmul.f32 %v671, %v244
    %v798 = vmul.f32 %v676, %v245
    %v799 = vmul.f32 %v681, %v246
    %v800 = vmul.f32 %v686, %v247
    %v801 = vmul.f32 %v691, %v248
    %v802 = vmul.f32 %v696, %v249
    %v803 = vmul.f32 %v701, %v250
    %v804 = vmul.f32 %v706, %v251
    %v805 = vmul.f32 %v711, %v252
    %v806 = vmul.f32 %v716, %v253
    %v807 = vmul.f32 %v721, %v254
    %v808 = vmul.f32 %v726, %v255
    %v809 = vmul.f32 %v731, %v256
    %v810 = vmul.f32 %v736, %v257
    %v811 = vmul.f32 %v741, %v258
    %v812 = vmul.f32 %v746, %v259
    %v813 = vmul.f32 %v751, %v260
    %v814 = vmul.f32 %v756, %v261
    %v815 = vmul.f32 %v761, %v262
    %v816 = vmul.f32 %v766, %v263
    %v817 = vmul.f32 %v771, %v264
    %v818 = vmul.f32 %v776, %v265
    %v819 = vmul.f32 %v781, %v266
    %v820 = vmul.f32 %v786, %v267
    %v821 = vmax.f32 %v789, 0.0
    %v822 = vmax.f32 %v790, 0.0
    %v823 = vmax.f32 %v791, 0.0
    %v824 = vmax.f32 %v792, 0.0
    %v825 = vmax.f32 %v793, 0.0
    %v826 = vmax.f32 %v794, 0.0
    %v827 = vmax.f32 %v795, 0.0
    %v828 = vmax.f32 %v796, 0.0
    %v829 = vmax.f32 %v797, 0.0
    %v830 = vmax.f32 %v798, 0.0
    %v831 = vmax.f32 %v799, 0.0
    %v832 = vmax.f32 %v800, 0.0
    %v833 = vmax.f32 %v801, 0.0
    %v834 = vmax.f32 %v802, 0.0
    %v835 = vmax.f32 %v803, 0.0
    %v836 = vmax.f32 %v804, 0.0
    %v837 = vmax.f32 %v805, 0.0
    %v838 = vmax.f32 %v806, 0.0
    %v839 = vmax.f32 %v807, 0.0
    %v840 = vmax.f32 %v808, 0.0
    %v841 = vmax.f32 %v809, 0.0
    %v842 = vmax.f32 %v810, 0.0
    %v843 = vmax.f32 %v811, 0.0
    %v844 = vmax.f32 %v812, 0.0
    %v845 = vmax.f32 %v813, 0.0
    %v846 = vmax.f32 %v814, 0.0
    %v847 = vmax.f32 %v815, 0.0
    %v848 = vmax.f32 %v816, 0.0
    %v849 = vmax.f32 %v817, 0.0
    %v850 = vmax.f32 %v818, 0.0
    %v851 = vmax.f32 %v819, 0.0
    %v852 = vmax.f32 %v820, 0.0
    %853 = vst [vmem:[#allocation8] sm:$0xff] %v821
    %854 = vst [vmem:[#allocation8 + $0x8] sm:$0xff] %v822
    %855 = vst [vmem:[#allocation8 + $0x10] sm:$0xff] %v823
    %856 = vst [vmem:[#allocation8 + $0x18] sm:$0xff] %v824
    %857 = vst [vmem:[#allocation8 + $0x20] sm:$0xff] %v825
    %858 = vst [vmem:[#allocation8 + $0x28] sm:$0xff] %v826
    %859 = vst [vmem:[#allocation8 + $0x30] sm:$0xff] %v827
    %860 = vst [vmem:[#allocation8 + $0x38] sm:$0xff] %v828
    %861 = vst [vmem:[#allocation8 + $0x40] sm:$0xff] %v829
    %862 = vst [vmem:[#allocation8 + $0x48] sm:$0xff] %v830
    %863 = vst [vmem:[#allocation8 + $0x50] sm:$0xff] %v831
    %864 = vst [vmem:[#allocation8 + $0x58] sm:$0xff] %v832
    %865 = vst [vmem:[#allocation8 + $0x60] sm:$0xff] %v833
    %866 = vst [vmem:[#allocation8 + $0x68] sm:$0xff] %v834
    %867 = vst [vmem:[#allocation8 + $0x70] sm:$0xff] %v835
    %868 = vst [vmem:[#allocation8 + $0x78] sm:$0xff] %v836
    %869 = vst [vmem:[#allocation8 + $0x80] sm:$0xff] %v837
    %870 = vst [vmem:[#allocation8 + $0x88] sm:$0xff] %v838
    %871 = vst [vmem:[#allocation8 + $0x90] sm:$0xff] %v839
    %872 = vst [vmem:[#allocation8 + $0x98] sm:$0xff] %v840
    %873 = vst [vmem:[#allocation8 + $0xa0] sm:$0xff] %v841
    %874 = vst [vmem:[#allocation8 + $0xa8] sm:$0xff] %v842
    %875 = vst [vmem:[#allocation8 + $0xb0] sm:$0xff] %v843
    %876 = vst [vmem:[#allocation8 + $0xb8] sm:$0xff] %v844
    %877 = vst [vmem:[#allocation8 + $0xc0] sm:$0xff] %v845
    %878 = vst [vmem:[#allocation8 + $0xc8] sm:$0xff] %v846
    %879 = vst [vmem:[#allocation8 + $0xd0] sm:$0xff] %v847
    %880 = vst [vmem:[#allocation8 + $0xd8] sm:$0xff] %v848
    %881 = vst [vmem:[#allocation8 + $0xe0] sm:$0xff] %v849
    %882 = vst [vmem:[#allocation8 + $0xe8] sm:$0xff] %v850
    %883 = vst [vmem:[#allocation8 + $0xf0] sm:$0xff] %v851
    %884 = vst [vmem:[#allocation8 + $0xf8] sm:$0xff] %v852
    // Predicated region
    $region30: #{tpu_custom_call.1} parent=1 // pred_check
      _
    $region31: #{tpu_custom_call.1} parent=1 // pred_check_branch
      %886 = sbr.rel (0) target = $region33
    $region32: #{tpu_custom_call.1} parent=1 // pred_region
      %s888 = ssub.s32 4096, 4096
      %889 = vsyncadd [#allocation4], %s888
      %s890 = sshll.u32 [#allocation8], 4
      %s891 = int_to_ptr.vmem [resolvable:$true] %s890
      %896 = dma.vmem_to_hbm [thread:$0]  %s891, 4096, %s4, [#allocation4], 128, 128, 8
    $region33: #{tpu_custom_call.1} parent=1 // pred_fallthru
      _
    // Predicated region
    $region34: #{tpu_custom_call.1} parent=1 // pred_check
      _
    $region35: #{tpu_custom_call.1} parent=1 // pred_check_branch
      %898 = sbr.rel (0) target = $region37
    $region36: #{tpu_custom_call.1} parent=1 // pred_region
      %899 = dma.done [#allocation4], 4096
    $region37: #{tpu_custom_call.1} parent=1 // pred_fallthru
      _
    %900 = vsyncpa [#allocation3], 1
    %901 = vsyncpa [#allocation6], 1
    %902 = vsyncpa [#allocation4], 1

</llo_original>
